<compile_context>
chip_gen: v6e
topology: v6e:2x2x1
jax: 0.10.0
libtpu: 0.0.40
codegen_flags: <defaults>
</compile_context>

<pallas_src>
import jax
import jax.numpy as jnp
from jax.experimental import pallas as pl
from jax.experimental.pallas import tpu as pltpu  # noqa: F401  (TPU backend)


def _linear_kernel(x_ref, wt_ref, o_ref):
    # x_ref: (M, K) f32, wt_ref: (K, N) bf16 (pre-transposed, native MXU layout).
    # bf16 operands, f32 accumulation on the MXU.
    o_ref[...] = jnp.dot(
        x_ref[...].astype(jnp.bfloat16),
        wt_ref[...],
        preferred_element_type=jnp.float32,
    ).astype(o_ref.dtype)


def prepare_weight(weight):
    """One-time parameter transform (pay transpose + cast outside the hot path).

    weight: (num_regions, in_features) as stored by nn.Linear.
    returns: (in_features, num_regions) bf16, lane-dense along N.
    """
    return jnp.asarray(weight).T.astype(jnp.bfloat16)


def classifier1_forward(x, weight_t):
    """y = x @ W.T, with weight_t = prepare_weight(W) of shape (in_features, num_regions)."""
    M, K = x.shape
    K2, N = weight_t.shape
    assert K == K2

    cost = pl.CostEstimate(
        flops=2 * M * N * K,
        bytes_accessed=4 * M * K + 2 * K * N + 4 * M * N,
        transcendentals=0,
    )

    return pl.pallas_call(
        _linear_kernel,
        out_shape=jax.ShapeDtypeStruct((M, N), x.dtype),
        in_specs=[
            pl.BlockSpec((M, K), lambda: (0, 0)),  # full x resident in VMEM
            pl.BlockSpec((K, N), lambda: (0, 0)),  # full pre-transposed bf16 weight
        ],
        out_specs=pl.BlockSpec((M, N), lambda: (0, 0)),
        cost_estimate=cost,
    )(x, weight_t)


if __name__ == "__main__":
    # Small shapes consistent with the module: batch=8, in_features=256, num_regions=128
    batch, in_features, num_regions = 8, 256, 128

    key = jax.random.PRNGKey(0)
    kx, kw = jax.random.split(key)
    x = jax.random.normal(kx, (batch, in_features), dtype=jnp.float32)
    # Deterministic weight init (mimics nn.Linear's uniform(-1/sqrt(fan_in), 1/sqrt(fan_in)))
    bound = 1.0 / jnp.sqrt(jnp.float32(in_features))
    weight = jax.random.uniform(
        kw, (num_regions, in_features), minval=-bound, maxval=bound, dtype=jnp.float32
    )

    # One-time parameter prep (transpose + bf16), then run the kernel.
    weight_t = prepare_weight(weight)
    y = classifier1_forward(x, weight_t)
    y = jax.block_until_ready(y)

    # Correctness check against plain-JAX reference of the PyTorch forward.
    # Tolerance relaxed for bf16 operands (f32 accumulation keeps error bounded at K=256).
    y_ref = x @ weight.T
    assert y.shape == (batch, num_regions)
    assert jnp.allclose(y, y_ref, atol=2e-2, rtol=2e-2)

    print("KERNEL_OK")
</pallas_src>

<mosaic_0001>
module attributes {stable_mosaic.version = 11 : i64} {
  func.func @_linear_kernel(%arg0: memref<8x256xf32, #tpu.memory_space<vmem>>, %arg1: memref<256x128xbf16, #tpu.memory_space<vmem>>, %arg2: memref<8x128xf32, #tpu.memory_space<vmem>>) attributes {dimension_semantics = [], scalar_prefetch = 0 : i64, scratch_operands = 0 : i64, tpu.core_type = #tpu.core_type<tc>} {
    %c0 = arith.constant 0 : index
    %c0_0 = arith.constant 0 : index
    %0 = vector.load %arg0[%c0, %c0_0] : memref<8x256xf32, #tpu.memory_space<vmem>>, vector<8x256xf32>
    %1 = arith.truncf %0 : vector<8x256xf32> to vector<8x256xbf16>
    %c0_1 = arith.constant 0 : index
    %c0_2 = arith.constant 0 : index
    %2 = vector.load %arg1[%c0_1, %c0_2] : memref<256x128xbf16, #tpu.memory_space<vmem>>, vector<256x128xbf16>
    %cst = arith.constant dense<0.000000e+00> : vector<8x128xf32>
    %3 = tpu.matmul %1, %2, %cst {dimension_numbers = #tpu.dot_dimension_numbers<[1], [0], [0], [1], [0, 0, 1, 1], [], []>} : vector<8x256xbf16>, vector<256x128xbf16>, vector<8x128xf32> -> vector<8x128xf32>
    %c0_3 = arith.constant 0 : index
    %c0_4 = arith.constant 0 : index
    %4 = vector.load %arg2[%c0_3, %c0_4] : memref<8x128xf32, #tpu.memory_space<vmem>>, vector<8x128xf32>
    tpu.vector_store %arg2[%c0_3, %c0_4], %3 {strides = array<i32>} : memref<8x128xf32, #tpu.memory_space<vmem>>, vector<8x128xf32>,
    return
  }
}

</mosaic_0001>

<llo_original>
// kernel: tpu_custom_call.1
$region0: #{tpu_custom_call.1}
  #allocation0 [shape = 'u32[]', space=smem, size = 0x4, offset = 0x4, fixed_abs, tag = 'smem constant byte address 0x4 - core index']
  #allocation1 [shape = 'u32[144,128]{1,0:T(1,128)}', space=vmem, size = 0x12000, scoped, tag = 'internal scratch']
  %s0 = inlined_call_operand.hbm [shape: f32[8,256], index: 0, kind: input, shape index: {}]
  %s1 = inlined_call_operand.hbm [shape: bf16[256,128], index: 1, kind: input, shape index: {}]
  %s2 = inlined_call_operand.hbm [shape: f32[8,128], index: 2, kind: output, shape index: {}]
  %s3 = sld [smem:[#allocation0]]
  $region26: #{tpu_custom_call.1} parent=0
    _
  %s5 = ssub.s32 1, %s3
  %s6 = scalar_select 0, %s5, %s3
  $region1: #{tpu_custom_call.1} parent=0
    #allocation2 [shape = 'u8[8192]{0}', space=vmem, size = 0x2000, scoped, tag = 'input window, operand 0, single buffered']
    #allocation3 [shape = 's32[1]{0}', space=sflag, size = 0x4, scoped, tag = 'scoped memory for tpu_custom_call.1']
    #allocation4 [shape = 's32[1]{0}', space=sflag, size = 0x4, scoped, tag = 'scoped memory for tpu_custom_call.1']
    #allocation5 [shape = 'u8[65536]{0}', space=vmem, size = 0x10000, scoped, tag = 'input window, operand 1, single buffered']
    #allocation6 [shape = 's32[1]{0}', space=sflag, size = 0x4, scoped, tag = 'scoped memory for tpu_custom_call.1']
    #allocation7 [shape = 'u8[4096]{0}', space=vmem, size = 0x1000, scoped, tag = 'output window, operand 0, single buffered']
    %7 = vsyncpa [#allocation3], 0
    %8 = vsyncpa [#allocation6], 0
    %9 = vsyncpa [#allocation4], 0
    // Predicated region
    $region2: #{tpu_custom_call.1} parent=1 // pred_check
      _
    $region3: #{tpu_custom_call.1} parent=1 // pred_check_branch
      %11 = sbr.rel (0) target = $region5
    $region4: #{tpu_custom_call.1} parent=1 // pred_region
      %s13 = ssub.s32 256, 256
      %14 = vsyncadd [#allocation3], %s13
      %s16 = sshll.u32 [#allocation2], 4
      %s17 = int_to_ptr.vmem [resolvable:$true] %s16
      %19 = dma.hbm_to_vmem [thread:$0]  %s0, 256, %s17, [#allocation3]
    $region5: #{tpu_custom_call.1} parent=1 // pred_fallthru
      _
    // Predicated region
    $region6: #{tpu_custom_call.1} parent=1 // pred_check
      _
    $region7: #{tpu_custom_call.1} parent=1 // pred_check_branch
      %21 = sbr.rel (0) target = $region9
    $region8: #{tpu_custom_call.1} parent=1 // pred_region
      %s23 = ssub.s32 2048, 2048
      %24 = vsyncadd [#allocation6], %s23
      %s25 = sshll.u32 [#allocation5], 4
      %s26 = int_to_ptr.vmem [resolvable:$true] %s25
      %31 = dma.hbm_to_vmem [thread:$0]  %s1, 2048, %s26, [#allocation6], 64, 64, 4
    $region9: #{tpu_custom_call.1} parent=1 // pred_fallthru
      _
    // Predicated region
    $region10: #{tpu_custom_call.1} parent=1 // pred_check
      _
    $region11: #{tpu_custom_call.1} parent=1 // pred_check_branch
      %33 = sbr.rel (0) target = $region13
    $region12: #{tpu_custom_call.1} parent=1 // pred_region
      %34 = dma.done [#allocation3], 256
    $region13: #{tpu_custom_call.1} parent=1 // pred_fallthru
      _
    // Predicated region
    $region14: #{tpu_custom_call.1} parent=1 // pred_check
      _
    $region15: #{tpu_custom_call.1} parent=1 // pred_check_branch
      %36 = sbr.rel (0) target = $region17
    $region16: #{tpu_custom_call.1} parent=1 // pred_region
      %37 = dma.done [#allocation6], 2048
    $region17: #{tpu_custom_call.1} parent=1 // pred_fallthru
      _
    %v39 = vld [vmem:[#allocation2] sm:$0xff]
    %v40 = vld [vmem:[#allocation2 + $0x8] sm:$0xff]
    %v41 = vpack.c.bf16 %v39, %v39
    %v42 = vpack.c.bf16 %v40, %v40
    %v43 = vld [vmem:[#allocation5] sm:$0xf]
    %v44 = vld [vmem:[#allocation5 + $0x4] sm:$0xf]
    %v45 = vld [vmem:[#allocation5 + $0x8] sm:$0xf]
    %v46 = vld [vmem:[#allocation5 + $0xc] sm:$0xf]
    %v47 = vld [vmem:[#allocation5 + $0x10] sm:$0xf]
    %v48 = vld [vmem:[#allocation5 + $0x14] sm:$0xf]
    %v49 = vld [vmem:[#allocation5 + $0x18] sm:$0xf]
    %v50 = vld [vmem:[#allocation5 + $0x1c] sm:$0xf]
    %v51 = vld [vmem:[#allocation5 + $0x20] sm:$0xf]
    %v52 = vld [vmem:[#allocation5 + $0x24] sm:$0xf]
    %v53 = vld [vmem:[#allocation5 + $0x28] sm:$0xf]
    %v54 = vld [vmem:[#allocation5 + $0x2c] sm:$0xf]
    %v55 = vld [vmem:[#allocation5 + $0x30] sm:$0xf]
    %v56 = vld [vmem:[#allocation5 + $0x34] sm:$0xf]
    %v57 = vld [vmem:[#allocation5 + $0x38] sm:$0xf]
    %v58 = vld [vmem:[#allocation5 + $0x3c] sm:$0xf]
    %v59 = vld [vmem:[#allocation5 + $0x40] sm:$0xf]
    %v60 = vld [vmem:[#allocation5 + $0x44] sm:$0xf]
    %v61 = vld [vmem:[#allocation5 + $0x48] sm:$0xf]
    %v62 = vld [vmem:[#allocation5 + $0x4c] sm:$0xf]
    %v63 = vld [vmem:[#allocation5 + $0x50] sm:$0xf]
    %v64 = vld [vmem:[#allocation5 + $0x54] sm:$0xf]
    %v65 = vld [vmem:[#allocation5 + $0x58] sm:$0xf]
    %v66 = vld [vmem:[#allocation5 + $0x5c] sm:$0xf]
    %v67 = vld [vmem:[#allocation5 + $0x60] sm:$0xf]
    %v68 = vld [vmem:[#allocation5 + $0x64] sm:$0xf]
    %v69 = vld [vmem:[#allocation5 + $0x68] sm:$0xf]
    %v70 = vld [vmem:[#allocation5 + $0x6c] sm:$0xf]
    %v71 = vld [vmem:[#allocation5 + $0x70] sm:$0xf]
    %v72 = vld [vmem:[#allocation5 + $0x74] sm:$0xf]
    %v73 = vld [vmem:[#allocation5 + $0x78] sm:$0xf]
    %v74 = vld [vmem:[#allocation5 + $0x7c] sm:$0xf]
    %v107 = vunpack.c.l.b16 %v43
    %v108 = vunpack.c.l.b16 %v44
    %v109 = vunpack.c.l.b16 %v45
    %v110 = vunpack.c.l.b16 %v46
    %v111 = vunpack.c.l.b16 %v47
    %v112 = vunpack.c.l.b16 %v48
    %v113 = vunpack.c.l.b16 %v49
    %v114 = vunpack.c.l.b16 %v50
    %v115 = vunpack.c.l.b16 %v51
    %v116 = vunpack.c.l.b16 %v52
    %v117 = vunpack.c.l.b16 %v53
    %v118 = vunpack.c.l.b16 %v54
    %v119 = vunpack.c.l.b16 %v55
    %v120 = vunpack.c.l.b16 %v56
    %v121 = vunpack.c.l.b16 %v57
    %v122 = vunpack.c.l.b16 %v58
    %v123 = vunpack.c.l.b16 %v59
    %v124 = vunpack.c.l.b16 %v60
    %v125 = vunpack.c.l.b16 %v61
    %v126 = vunpack.c.l.b16 %v62
    %v127 = vunpack.c.l.b16 %v63
    %v128 = vunpack.c.l.b16 %v64
    %v129 = vunpack.c.l.b16 %v65
    %v130 = vunpack.c.l.b16 %v66
    %v131 = vunpack.c.l.b16 %v67
    %v132 = vunpack.c.l.b16 %v68
    %v133 = vunpack.c.l.b16 %v69
    %v134 = vunpack.c.l.b16 %v70
    %v135 = vunpack.c.l.b16 %v71
    %v136 = vunpack.c.l.b16 %v72
    %v137 = vunpack.c.l.b16 %v73
    %v138 = vunpack.c.l.b16 %v74
    %v139 = vpack.c.b16 %v108, %v107
    %v140 = vpack.c.b16 %v110, %v109
    %v141 = vpack.c.b16 %v112, %v111
    %v142 = vpack.c.b16 %v114, %v113
    %v143 = vpack.c.b16 %v116, %v115
    %v144 = vpack.c.b16 %v118, %v117
    %v145 = vpack.c.b16 %v120, %v119
    %v146 = vpack.c.b16 %v122, %v121
    %v147 = vpack.c.b16 %v124, %v123
    %v148 = vpack.c.b16 %v126, %v125
    %v149 = vpack.c.b16 %v128, %v127
    %v150 = vpack.c.b16 %v130, %v129
    %v151 = vpack.c.b16 %v132, %v131
    %v152 = vpack.c.b16 %v134, %v133
    %v153 = vpack.c.b16 %v136, %v135
    %v154 = vpack.c.b16 %v138, %v137
    %171 = vmatprep.subr.bf16.mxu0 0
    %172 = vmatpush1.bf16.msra.mxu0 %v146
    %173 = vmatprep.subr.bf16.mxu0 0
    %174 = vmatpush1.bf16.msra.mxu0 %v145
    %175 = vmatprep.subr.bf16.mxu0 0
    %176 = vmatpush1.bf16.msra.mxu0 %v144
    %177 = vmatprep.subr.bf16.mxu0 0
    %178 = vmatpush1.bf16.msra.mxu0 %v143
    %179 = vmatprep.subr.bf16.mxu0 0
    %180 = vmatpush1.bf16.msra.mxu0 %v142
    %181 = vmatprep.subr.bf16.mxu0 0
    %182 = vmatpush1.bf16.msra.mxu0 %v141
    %183 = vmatprep.subr.bf16.mxu0 0
    %184 = vmatpush1.bf16.msra.mxu0 %v140
    %185 = vmatprep.subr.bf16.mxu0 0
    %186 = vmatpush1.bf16.msra.mxu0 %v139
    %187 = vmatprep.subr.bf16.mxu0 0
    %188 = vmatpush2.bf16.msra.mxu0 %v154
    %189 = vmatprep.subr.bf16.mxu0 0
    %190 = vmatpush2.bf16.msra.mxu0 %v153
    %191 = vmatprep.subr.bf16.mxu0 0
    %192 = vmatpush2.bf16.msra.mxu0 %v152
    %193 = vmatprep.subr.bf16.mxu0 0
    %194 = vmatpush2.bf16.msra.mxu0 %v151
    %195 = vmatprep.subr.bf16.mxu0 0
    %196 = vmatpush2.bf16.msra.mxu0 %v150
    %197 = vmatprep.subr.bf16.mxu0 0
    %198 = vmatpush2.bf16.msra.mxu0 %v149
    %199 = vmatprep.subr.bf16.mxu0 0
    %200 = vmatpush2.bf16.msra.mxu0 %v148
    %201 = vmatprep.subr.bf16.mxu0 0
    %202 = vmatpush2.bf16.msra.mxu0 %v147
    %203 = vmatprep.mubr.bf16.mxu0 %v42
    %204 = vmatmul.mubr.bf16.gmra.mxu0 %v41
    %v205 = vpop.f32.mrf.mxu0
    %v206 = vadd.f32 0.0, %v205
    %v207 = vpop.f32.mrf.mxu0
    %v208 = vpop.f32.mrf.mxu0
    %v209 = vpop.f32.mrf.mxu0
    %210 = vdwg.mxu0
    %211 = vst [vmem:[#allocation7] sm:$0xff] %v206
    // Predicated region
    $region18: #{tpu_custom_call.1} parent=1 // pred_check
      _
    $region19: #{tpu_custom_call.1} parent=1 // pred_check_branch
      %213 = sbr.rel (0) target = $region21
    $region20: #{tpu_custom_call.1} parent=1 // pred_region
      %s215 = ssub.s32 128, 128
      %216 = vsyncadd [#allocation4], %s215
      %s218 = sshll.u32 [#allocation7], 4
      %s219 = int_to_ptr.vmem [resolvable:$true] %s218
      %221 = dma.vmem_to_hbm [thread:$0]  %s219, 128, %s2, [#allocation4]
    $region21: #{tpu_custom_call.1} parent=1 // pred_fallthru
      _
    // Predicated region
    $region22: #{tpu_custom_call.1} parent=1 // pred_check
      _
    $region23: #{tpu_custom_call.1} parent=1 // pred_check_branch
      %223 = sbr.rel (0) target = $region25
    $region24: #{tpu_custom_call.1} parent=1 // pred_region
      %224 = dma.done [#allocation4], 128
    $region25: #{tpu_custom_call.1} parent=1 // pred_fallthru
      _
    %225 = vsyncpa [#allocation3], 1
    %226 = vsyncpa [#allocation6], 1
    %227 = vsyncpa [#allocation4], 1

</llo_original>
